<compile_context>
chip_gen: v6e
topology: v6e:2x2x1
jax: 0.10.0
libtpu: 0.0.40
codegen_flags: <defaults>
</compile_context>

<pallas_src>
import jax
import jax.numpy as jnp
from jax.experimental import pallas as pl
from jax.experimental.pallas import tpu as pltpu

NFEAT = 100   # Flatten output (2 channels * 50 pixels)
NHID = 128    # hidden width
NOUT = 10     # logits


def simple_model_kernel(x_ref, w1_ref, b1_ref, w2_ref, b2_ref, o_ref):
    # x_ref:  [TB, 100] bf16      w1_ref: [100, 128] bf16   b1_ref: [1, 128] f32
    # w2_ref: [128, 10] bf16      b2_ref: [1, 10]  f32      o_ref:  [TB, 10] f32
    h = jnp.dot(x_ref[...], w1_ref[...],
                preferred_element_type=jnp.float32)        # MXU, f32 accumulate
    h = jnp.maximum(h + b1_ref[...], 0.0)                  # bias + ReLU in f32
    o_ref[...] = jnp.dot(h.astype(jnp.bfloat16), w2_ref[...],
                         preferred_element_type=jnp.float32) + b2_ref[...]


def prepare_params(params):
    """One-time prep: fold the 1x1 conv into Linear1, transpose, cast to bf16."""
    wc, bc, w1, b1, w2, b2 = params
    P = NFEAT // 2
    wc2 = wc.reshape(2, 2).astype(jnp.float32)             # Conv2d weight (2,2,1,1) -> (out,in)
    bcf = bc.astype(jnp.float32)
    w1t = w1.T.astype(jnp.float32)                          # [100, 128]
    w1a, w1b = w1t[:P, :], w1t[P:, :]                       # rows for conv out-ch 0 / 1
    w_eff = jnp.concatenate(
        [wc2[0, 0] * w1a + wc2[1, 0] * w1b,                 # multiplies input ch 0
         wc2[0, 1] * w1a + wc2[1, 1] * w1b],                # multiplies input ch 1
        axis=0)                                             # [100, 128]
    b_eff = (b1.astype(jnp.float32)
             + bcf[0] * jnp.sum(w1a, axis=0)
             + bcf[1] * jnp.sum(w1b, axis=0)).reshape(1, NHID)
    w2t = w2.T.astype(jnp.float32)                          # [128, 10]
    return (w_eff.astype(jnp.bfloat16),
            b_eff,                                          # f32
            w2t.astype(jnp.bfloat16),
            b2.astype(jnp.float32).reshape(1, NOUT))


def _round8_up(n):
    return ((n + 7) // 8) * 8


def simple_model_forward(x, prepped, tb=4096):
    """x: [B, 2, H, W] float32 with 2*H*W == 100. Returns [B, 10] float32."""
    w_eff, b_eff, w2p, b2p = prepped
    B, C, H, W = x.shape
    assert C == 2 and C * H * W == NFEAT, "Flatten must produce 100 features"

    # lane-dense input: C-major flatten (matches nn.Flatten), bf16 for the MXU
    x_flat = x.reshape(B, NFEAT).astype(jnp.bfloat16)

    # --- batch tile selection (multiple of 8; no input padding needed) ------
    tb8 = max(8, (int(tb) // 8) * 8)
    if B <= 8:
        TB = B                                   # tiny batch: one full-array block
    elif B <= tb8:
        # at least 2 grid steps so v7x megacore can shard the batch axis
        TB = min(tb8, _round8_up(pl.cdiv(B, 2)))
    else:
        TB = tb8
    grid = (pl.cdiv(B, TB),)                     # ragged last block handled by Pallas

    cost = pl.CostEstimate(
        flops=2 * B * (NFEAT * NHID + NHID * NOUT),
        transcendentals=0,
        bytes_accessed=(B * NFEAT * 2 + B * NOUT * 4
                        + NFEAT * NHID * 2 + NHID * NOUT * 2
                        + NHID * 4 + NOUT * 4),
    )

    out = pl.pallas_call(
        simple_model_kernel,
        out_shape=jax.ShapeDtypeStruct((B, NOUT), jnp.float32),
        grid_spec=pltpu.PrefetchScalarGridSpec(
            num_scalar_prefetch=0,
            grid=grid,
            in_specs=[
                pl.BlockSpec((TB, NFEAT), lambda i: (i, 0)),    # x tile (bf16)
                pl.BlockSpec((NFEAT, NHID), lambda i: (0, 0)),  # W_eff (bf16)
                pl.BlockSpec((1, NHID), lambda i: (0, 0)),      # b_eff (f32)
                pl.BlockSpec((NHID, NOUT), lambda i: (0, 0)),   # W2    (bf16)
                pl.BlockSpec((1, NOUT), lambda i: (0, 0)),      # b2    (f32)
            ],
            out_specs=pl.BlockSpec((TB, NOUT), lambda i: (i, 0)),
        ),
        compiler_params=pltpu.CompilerParams(
            dimension_semantics=("parallel",)),
        cost_estimate=cost,
    )(x_flat, w_eff, b_eff, w2p, b2p)
    return out


def init_params(key):
    """Deterministic synthetic parameters matching the PyTorch module shapes."""
    ks = jax.random.split(key, 6)
    wc = jax.random.normal(ks[0], (2, 2, 1, 1), jnp.float32) * 0.5   # Conv2d(2,2,(1,1))
    bc = jax.random.normal(ks[1], (2,), jnp.float32) * 0.1
    w1 = jax.random.normal(ks[2], (128, 100), jnp.float32) * 0.1     # Linear(100,128)
    b1 = jax.random.normal(ks[3], (128,), jnp.float32) * 0.1
    w2 = jax.random.normal(ks[4], (10, 128), jnp.float32) * 0.1      # Linear(128,10)
    b2 = jax.random.normal(ks[5], (10,), jnp.float32) * 0.1
    return wc, bc, w1, b1, w2, b2


def reference_forward(x, params):
    """Pure-JAX f32 reference mirroring the PyTorch forward."""
    wc, bc, w1, b1, w2, b2 = params
    B = x.shape[0]
    y = jnp.einsum('oi,bihw->bohw', wc.reshape(2, 2), x) + bc[None, :, None, None]
    f = y.reshape(B, -1)                                   # Flatten (C,H,W)
    h = jnp.maximum(f @ w1.T + b1, 0.0)                    # Linear + ReLU
    return h @ w2.T + b2                                   # Linear


if __name__ == "__main__":
    key = jax.random.PRNGKey(0)
    kx, kx2, kp = jax.random.split(key, 3)

    params = init_params(kp)
    prepped = prepare_params(params)          # one-time prep, hoisted out of forward

    # B=2, C=2, H=5, W=10 so Flatten -> 100 features (matches Linear(100,128)).
    x = jax.random.normal(kx, (2, 2, 5, 10), jnp.float32)
    out = jax.block_until_ready(simple_model_forward(x, prepped))
    ref = reference_forward(x, params)
    assert out.shape == (2, 10)
    assert jnp.allclose(out, ref, atol=5e-2, rtol=5e-2), "Pallas output mismatch vs reference (B=2)"

    # Ragged multi-step grid path (B=20 -> TB=16, 2 grid steps, masked last block).
    x2 = jax.random.normal(kx2, (20, 2, 5, 10), jnp.float32)
    out2 = jax.block_until_ready(simple_model_forward(x2, prepped))
    ref2 = reference_forward(x2, params)
    assert out2.shape == (20, 10)
    assert jnp.allclose(out2, ref2, atol=5e-2, rtol=5e-2), "Pallas output mismatch vs reference (B=20)"

    print("KERNEL_OK")
</pallas_src>

<mosaic_0001>
module attributes {stable_mosaic.version = 11 : i64} {
  func.func @simple_model_kernel(%arg0: i32, %arg1: memref<2x100xbf16, #tpu.memory_space<vmem>>, %arg2: memref<100x128xbf16, #tpu.memory_space<vmem>>, %arg3: memref<1x128xf32, #tpu.memory_space<vmem>>, %arg4: memref<128x10xbf16, #tpu.memory_space<vmem>>, %arg5: memref<1x10xf32, #tpu.memory_space<vmem>>, %arg6: memref<2x10xf32, #tpu.memory_space<vmem>>) attributes {dimension_semantics = [#tpu.dimension_semantics<parallel>], iteration_bounds = array<i64: 1>, scalar_prefetch = 0 : i64, scratch_operands = 0 : i64, tpu.core_type = #tpu.core_type<tc>, window_params = [{transform_indices = @transform_0, window_bounds = array<i64: 2, 100>}, {pipeline_mode = #tpu.pipeline_mode<synchronous>, transform_indices = @transform_1, window_bounds = array<i64: 100, 128>}, {pipeline_mode = #tpu.pipeline_mode<synchronous>, transform_indices = @transform_2, window_bounds = array<i64: 1, 128>}, {pipeline_mode = #tpu.pipeline_mode<synchronous>, transform_indices = @transform_3, window_bounds = array<i64: 128, 10>}, {pipeline_mode = #tpu.pipeline_mode<synchronous>, transform_indices = @transform_4, window_bounds = array<i64: 1, 10>}, {transform_indices = @transform_5, window_bounds = array<i64: 2, 10>}]} {
    %c0 = arith.constant 0 : index
    %c0_0 = arith.constant 0 : index
    %0 = vector.load %arg1[%c0, %c0_0] : memref<2x100xbf16, #tpu.memory_space<vmem>>, vector<2x100xbf16>
    %c0_1 = arith.constant 0 : index
    %c0_2 = arith.constant 0 : index
    %1 = vector.load %arg2[%c0_1, %c0_2] : memref<100x128xbf16, #tpu.memory_space<vmem>>, vector<100x128xbf16>
    %cst = arith.constant dense<0.000000e+00> : vector<2x128xf32>
    %2 = tpu.matmul %0, %1, %cst {dimension_numbers = #tpu.dot_dimension_numbers<[1], [0], [0], [1], [0, 0, 1, 1], [], []>} : vector<2x100xbf16>, vector<100x128xbf16>, vector<2x128xf32> -> vector<2x128xf32>
    %c0_3 = arith.constant 0 : index
    %c0_4 = arith.constant 0 : index
    %3 = vector.load %arg3[%c0_3, %c0_4] : memref<1x128xf32, #tpu.memory_space<vmem>>, vector<1x128xf32>
    %4 = vector.broadcast %3 : vector<1x128xf32> to vector<2x128xf32>
    %5 = arith.addf %2, %4 : vector<2x128xf32>
    %cst_5 = arith.constant 0.000000e+00 : f32
    %6 = vector.broadcast %cst_5 : f32 to vector<2x128xf32>
    %7 = arith.maximumf %5, %6 : vector<2x128xf32>
    %8 = arith.truncf %7 : vector<2x128xf32> to vector<2x128xbf16>
    %c0_6 = arith.constant 0 : index
    %c0_7 = arith.constant 0 : index
    %9 = vector.load %arg4[%c0_6, %c0_7] : memref<128x10xbf16, #tpu.memory_space<vmem>>, vector<128x10xbf16>
    %cst_8 = arith.constant dense<0.000000e+00> : vector<2x10xf32>
    %10 = tpu.matmul %8, %9, %cst_8 {dimension_numbers = #tpu.dot_dimension_numbers<[1], [0], [0], [1], [0, 0, 1, 1], [], []>} : vector<2x128xbf16>, vector<128x10xbf16>, vector<2x10xf32> -> vector<2x10xf32>
    %c0_9 = arith.constant 0 : index
    %c0_10 = arith.constant 0 : index
    %11 = vector.load %arg5[%c0_9, %c0_10] : memref<1x10xf32, #tpu.memory_space<vmem>>, vector<1x10xf32>
    %12 = vector.broadcast %11 : vector<1x10xf32> to vector<2x10xf32>
    %13 = arith.addf %10, %12 : vector<2x10xf32>
    %c0_11 = arith.constant 0 : index
    %c0_12 = arith.constant 0 : index
    %14 = vector.load %arg6[%c0_11, %c0_12] : memref<2x10xf32, #tpu.memory_space<vmem>>, vector<2x10xf32>
    tpu.vector_store %arg6[%c0_11, %c0_12], %13 {strides = array<i32>} : memref<2x10xf32, #tpu.memory_space<vmem>>, vector<2x10xf32>,
    return
  }
  func.func @transform_0(%arg0: i32) -> (i32, i32) {
    %c0_i32 = arith.constant 0 : i32
    %c0_i32_0 = arith.constant 0 : i32
    return %arg0, %c0_i32 : i32, i32
  }
  func.func @transform_1(%arg0: i32) -> (i32, i32) {
    %c0_i32 = arith.constant 0 : i32
    %c0_i32_0 = arith.constant 0 : i32
    %c0_i32_1 = arith.constant 0 : i32
    return %c0_i32, %c0_i32_0 : i32, i32
  }
  func.func @transform_2(%arg0: i32) -> (i32, i32) {
    %c0_i32 = arith.constant 0 : i32
    %c0_i32_0 = arith.constant 0 : i32
    %c0_i32_1 = arith.constant 0 : i32
    return %c0_i32, %c0_i32_0 : i32, i32
  }
  func.func @transform_3(%arg0: i32) -> (i32, i32) {
    %c0_i32 = arith.constant 0 : i32
    %c0_i32_0 = arith.constant 0 : i32
    %c0_i32_1 = arith.constant 0 : i32
    return %c0_i32, %c0_i32_0 : i32, i32
  }
  func.func @transform_4(%arg0: i32) -> (i32, i32) {
    %c0_i32 = arith.constant 0 : i32
    %c0_i32_0 = arith.constant 0 : i32
    %c0_i32_1 = arith.constant 0 : i32
    return %c0_i32, %c0_i32_0 : i32, i32
  }
  func.func @transform_5(%arg0: i32) -> (i32, i32) {
    %c0_i32 = arith.constant 0 : i32
    %c0_i32_0 = arith.constant 0 : i32
    return %arg0, %c0_i32 : i32, i32
  }
}

</mosaic_0001>

<llo_original>
// kernel: tpu_custom_call.1
$region0: #{tpu_custom_call.1}
  #allocation0 [shape = 'u32[]', space=smem, size = 0x4, offset = 0x4, fixed_abs, tag = 'smem constant byte address 0x4 - core index']
  #allocation1 [shape = 'u32[144,128]{1,0:T(1,128)}', space=vmem, size = 0x12000, scoped, tag = 'internal scratch']
  %s0 = inlined_call_operand.vmem [shape: bf16[2,100], index: 0, kind: input, shape index: {}]
  %s1 = inlined_call_operand.vmem [shape: bf16[100,128], index: 1, kind: input, shape index: {}]
  %s2 = inlined_call_operand.vmem [shape: f32[1,128], index: 2, kind: input, shape index: {}]
  %s3 = inlined_call_operand.vmem [shape: bf16[128,10], index: 3, kind: input, shape index: {}]
  %s4 = inlined_call_operand.vmem [shape: f32[1,10], index: 4, kind: input, shape index: {}]
  %s5 = inlined_call_operand.hbm [shape: f32[2,10], index: 5, kind: output, shape index: {}]
  %s6 = sld [smem:[#allocation0]]
  $region30: #{tpu_custom_call.1} parent=0
    _
  %s8 = ssub.s32 1, %s6
  %s9 = scalar_select 0, %s8, %s6
  $region1: #{tpu_custom_call.1} parent=0
    #allocation2 [shape = 'u8[1024]{0}', space=vmem, size = 0x400, scoped, tag = 'output window, operand 0, single buffered']
    #allocation3 [shape = 's32[1]{0}', space=sflag, size = 0x4, scoped, tag = 'scoped memory for tpu_custom_call.1']
    %10 = vsyncpa [#allocation3], 0
    // Predicated region
    $region2: #{tpu_custom_call.1} parent=1 // pred_check
      _
    $region3: #{tpu_custom_call.1} parent=1 // pred_check_branch
      %12 = sbr.rel (0) target = $region5
    $region4: #{tpu_custom_call.1} parent=1 // pred_region
      _
    $region5: #{tpu_custom_call.1} parent=1 // pred_fallthru
      _
    // Predicated region
    $region6: #{tpu_custom_call.1} parent=1 // pred_check
      _
    $region7: #{tpu_custom_call.1} parent=1 // pred_check_branch
      %14 = sbr.rel (0) target = $region9
    $region8: #{tpu_custom_call.1} parent=1 // pred_region
      _
    $region9: #{tpu_custom_call.1} parent=1 // pred_fallthru
      _
    // Predicated region
    $region10: #{tpu_custom_call.1} parent=1 // pred_check
      _
    $region11: #{tpu_custom_call.1} parent=1 // pred_check_branch
      %16 = sbr.rel (0) target = $region13
    $region12: #{tpu_custom_call.1} parent=1 // pred_region
      _
    $region13: #{tpu_custom_call.1} parent=1 // pred_fallthru
      _
    // Predicated region
    $region14: #{tpu_custom_call.1} parent=1 // pred_check
      _
    $region15: #{tpu_custom_call.1} parent=1 // pred_check_branch
      %18 = sbr.rel (0) target = $region17
    $region16: #{tpu_custom_call.1} parent=1 // pred_region
      _
    $region17: #{tpu_custom_call.1} parent=1 // pred_fallthru
      _
    // Predicated region
    $region18: #{tpu_custom_call.1} parent=1 // pred_check
      _
    $region19: #{tpu_custom_call.1} parent=1 // pred_check_branch
      %20 = sbr.rel (0) target = $region21
    $region20: #{tpu_custom_call.1} parent=1 // pred_region
      _
    $region21: #{tpu_custom_call.1} parent=1 // pred_fallthru
      _
    %v22 = vld [vmem:[%s0] sm:$0x1]
    %v23 = vld [vmem:[%s1] sm:$0xf]
    %v24 = vld [vmem:[%s1 + $0x4] sm:$0xf]
    %v25 = vld [vmem:[%s1 + $0x8] sm:$0xf]
    %v26 = vld [vmem:[%s1 + $0xc] sm:$0xf]
    %v27 = vld [vmem:[%s1 + $0x10] sm:$0xf]
    %v28 = vld [vmem:[%s1 + $0x14] sm:$0xf]
    %v29 = vld [vmem:[%s1 + $0x18] sm:$0xf]
    %v30 = vld [vmem:[%s1 + $0x1c] sm:$0xf]
    %v31 = vld [vmem:[%s1 + $0x20] sm:$0xf]
    %v32 = vld [vmem:[%s1 + $0x24] sm:$0xf]
    %v33 = vld [vmem:[%s1 + $0x28] sm:$0xf]
    %v34 = vld [vmem:[%s1 + $0x2c] sm:$0xf]
    %v35 = vld [vmem:[%s1 + $0x30] sm:$0x3]
    %v36 = vld [vmem:[%s2] sm:$0x1]
    %v38 = vlaneseq
    %v39 = vshrl.u32 %v38, 7
    %v40 = vsub.s32 0, %v39
    %v41 = vrot.slane %v36, %v40
    %v56 = vunpack.c.l.b16 %v23
    %v57 = vunpack.c.l.b16 %v24
    %v58 = vunpack.c.l.b16 %v25
    %v59 = vunpack.c.l.b16 %v26
    %v60 = vunpack.c.l.b16 %v27
    %v61 = vunpack.c.l.b16 %v28
    %v62 = vunpack.c.l.b16 %v29
    %v63 = vunpack.c.l.b16 %v30
    %v64 = vunpack.c.l.b16 %v31
    %v65 = vunpack.c.l.b16 %v32
    %v66 = vunpack.c.l.b16 %v33
    %v67 = vunpack.c.l.b16 %v34
    %v68 = vunpack.c.l.b16 %v35
    %v69 = vpack.c.b16 %v57, %v56
    %v70 = vpack.c.b16 %v59, %v58
    %v71 = vpack.c.b16 %v61, %v60
    %v72 = vpack.c.b16 %v63, %v62
    %v73 = vpack.c.b16 %v65, %v64
    %v74 = vpack.c.b16 %v67, %v66
    %v75 = vpack.c.b16 %v68, %v68
    %vm82 = vcmask 818176
    %v84 = vsel %vm82, %v22, 0
    %vm86 = vcmask 1041408
    %v88 = vsel %vm86, %v75, 0
    %90 = vmatprep.subr.bf16.mxu0 0
    %91 = vmatpush1.bf16.msra.mxu0 0
    %92 = vmatprep.subr.bf16.mxu0 0
    %93 = vmatpush1.bf16.msra.mxu0 %v88
    %94 = vmatprep.subr.bf16.mxu0 0
    %95 = vmatpush1.bf16.msra.mxu0 %v74
    %96 = vmatprep.subr.bf16.mxu0 0
    %97 = vmatpush1.bf16.msra.mxu0 %v73
    %98 = vmatprep.subr.bf16.mxu0 0
    %99 = vmatpush1.bf16.msra.mxu0 %v72
    %100 = vmatprep.subr.bf16.mxu0 0
    %101 = vmatpush1.bf16.msra.mxu0 %v71
    %102 = vmatprep.subr.bf16.mxu0 0
    %103 = vmatpush1.bf16.msra.mxu0 %v70
    %104 = vmatprep.subr.bf16.mxu0 0
    %105 = vmatpush1.bf16.msra.mxu0 %v69
    %106 = vmatprep.subr.bf16.mxu0 0
    %107 = vmatpush2.bf16.msra.mxu0 0
    %108 = vmatprep.subr.bf16.mxu0 0
    %109 = vmatpush2.bf16.msra.mxu0 0
    %110 = vmatprep.subr.bf16.mxu0 0
    %111 = vmatpush2.bf16.msra.mxu0 0
    %112 = vmatprep.subr.bf16.mxu0 0
    %113 = vmatpush2.bf16.msra.mxu0 0
    %114 = vmatprep.subr.bf16.mxu0 0
    %115 = vmatpush2.bf16.msra.mxu0 0
    %116 = vmatprep.subr.bf16.mxu0 0
    %117 = vmatpush2.bf16.msra.mxu0 0
    %118 = vmatprep.subr.bf16.mxu0 0
    %119 = vmatpush2.bf16.msra.mxu0 0
    %120 = vmatprep.subr.bf16.mxu0 0
    %121 = vmatpush2.bf16.msra.mxu0 0
    %122 = vmatprep.mubr.bf16.mxu0 0
    %123 = vmatmul.mubr.bf16.gmra.mxu0 %v84
    %v124 = vpop.f32.mrf.mxu0
    %v125 = vadd.f32 %v41, %v124
    %v126 = vpop.f32.mrf.mxu0
    %v127 = vpop.f32.mrf.mxu0
    %v128 = vpop.f32.mrf.mxu0
    %129 = vdwg.mxu0
    %v130 = vmax.f32 %v125, 0.0
    %v131 = vpack.c.bf16 %v130, %v130
    %v132 = vld [vmem:[%s3] sm:$0xf]
    %v133 = vld [vmem:[%s3 + $0x4] sm:$0xf]
    %v134 = vld [vmem:[%s3 + $0x8] sm:$0xf]
    %v135 = vld [vmem:[%s3 + $0xc] sm:$0xf]
    %v136 = vld [vmem:[%s3 + $0x10] sm:$0xf]
    %v137 = vld [vmem:[%s3 + $0x14] sm:$0xf]
    %v138 = vld [vmem:[%s3 + $0x18] sm:$0xf]
    %v139 = vld [vmem:[%s3 + $0x1c] sm:$0xf]
    %v140 = vld [vmem:[%s3 + $0x20] sm:$0xf]
    %v141 = vld [vmem:[%s3 + $0x24] sm:$0xf]
    %v142 = vld [vmem:[%s3 + $0x28] sm:$0xf]
    %v143 = vld [vmem:[%s3 + $0x2c] sm:$0xf]
    %v144 = vld [vmem:[%s3 + $0x30] sm:$0xf]
    %v145 = vld [vmem:[%s3 + $0x34] sm:$0xf]
    %v146 = vld [vmem:[%s3 + $0x38] sm:$0xf]
    %v147 = vld [vmem:[%s3 + $0x3c] sm:$0xf]
    %v148 = vld [vmem:[%s4] sm:$0x1]
    %v150 = vlaneseq
    %v151 = vshrl.u32 %v150, 7
    %v152 = vsub.s32 0, %v151
    %v153 = vrot.slane %v148, %v152
    %v171 = vunpack.c.l.b16 %v132
    %v172 = vunpack.c.l.b16 %v133
    %v173 = vunpack.c.l.b16 %v134
    %v174 = vunpack.c.l.b16 %v135
    %v175 = vunpack.c.l.b16 %v136
    %v176 = vunpack.c.l.b16 %v137
    %v177 = vunpack.c.l.b16 %v138
    %v178 = vunpack.c.l.b16 %v139
    %v179 = vunpack.c.l.b16 %v140
    %v180 = vunpack.c.l.b16 %v141
    %v181 = vunpack.c.l.b16 %v142
    %v182 = vunpack.c.l.b16 %v143
    %v183 = vunpack.c.l.b16 %v144
    %v184 = vunpack.c.l.b16 %v145
    %v185 = vunpack.c.l.b16 %v146
    %v186 = vunpack.c.l.b16 %v147
    %v187 = vpack.c.b16 %v172, %v171
    %v188 = vpack.c.b16 %v174, %v173
    %v189 = vpack.c.b16 %v176, %v175
    %v190 = vpack.c.b16 %v178, %v177
    %v191 = vpack.c.b16 %v180, %v179
    %v192 = vpack.c.b16 %v182, %v181
    %v193 = vpack.c.b16 %v184, %v183
    %v194 = vpack.c.b16 %v186, %v185
    %203 = vmatprep.subr.bf16.mxu0 0
    %204 = vmatpush1.bf16.msra.mxu0 %v194
    %205 = vmatprep.subr.bf16.mxu0 0
    %206 = vmatpush1.bf16.msra.mxu0 %v193
    %207 = vmatprep.subr.bf16.mxu0 0
    %208 = vmatpush1.bf16.msra.mxu0 %v192
    %209 = vmatprep.subr.bf16.mxu0 0
    %210 = vmatpush1.bf16.msra.mxu0 %v191
    %211 = vmatprep.subr.bf16.mxu0 0
    %212 = vmatpush1.bf16.msra.mxu0 %v190
    %213 = vmatprep.subr.bf16.mxu0 0
    %214 = vmatpush1.bf16.msra.mxu0 %v189
    %215 = vmatprep.subr.bf16.mxu0 0
    %216 = vmatpush1.bf16.msra.mxu0 %v188
    %217 = vmatprep.subr.bf16.mxu0 0
    %218 = vmatpush1.bf16.msra.mxu0 %v187
    %219 = vmatprep.subr.bf16.mxu0 0
    %220 = vmatpush2.bf16.msra.mxu0 0
    %221 = vmatprep.subr.bf16.mxu0 0
    %222 = vmatpush2.bf16.msra.mxu0 0
    %223 = vmatprep.subr.bf16.mxu0 0
    %224 = vmatpush2.bf16.msra.mxu0 0
    %225 = vmatprep.subr.bf16.mxu0 0
    %226 = vmatpush2.bf16.msra.mxu0 0
    %227 = vmatprep.subr.bf16.mxu0 0
    %228 = vmatpush2.bf16.msra.mxu0 0
    %229 = vmatprep.subr.bf16.mxu0 0
    %230 = vmatpush2.bf16.msra.mxu0 0
    %231 = vmatprep.subr.bf16.mxu0 0
    %232 = vmatpush2.bf16.msra.mxu0 0
    %233 = vmatprep.subr.bf16.mxu0 0
    %234 = vmatpush2.bf16.msra.mxu0 0
    %235 = vmatprep.mubr.bf16.mxu0 0
    %236 = vmatmul.mubr.bf16.gmra.mxu0 %v131
    %v237 = vpop.f32.mrf.mxu0
    %v238 = vadd.f32 %v153, %v237
    %v239 = vpop.f32.mrf.mxu0
    %v240 = vpop.f32.mrf.mxu0
    %v241 = vpop.f32.mrf.mxu0
    %242 = vdwg.mxu0
    %vm243 = vcmask 74752
    %244 = vst.msk [vmem:[#allocation2] sm:$0x3] %vm243, %v238
    // Predicated region
    $region22: #{tpu_custom_call.1} parent=1 // pred_check
      _
    $region23: #{tpu_custom_call.1} parent=1 // pred_check_branch
      %246 = sbr.rel (0) target = $region25
    $region24: #{tpu_custom_call.1} parent=1 // pred_region
      %s248 = ssub.s32 32, 32
      %249 = vsyncadd [#allocation3], %s248
      %s251 = sshll.u32 [#allocation2], 4
      %s252 = int_to_ptr.vmem [resolvable:$true] %s251
      %254 = dma.vmem_to_hbm [thread:$0]  %s252, 32, %s5, [#allocation3]
    $region25: #{tpu_custom_call.1} parent=1 // pred_fallthru
      _
    // Predicated region
    $region26: #{tpu_custom_call.1} parent=1 // pred_check
      _
    $region27: #{tpu_custom_call.1} parent=1 // pred_check_branch
      %256 = sbr.rel (0) target = $region29
    $region28: #{tpu_custom_call.1} parent=1 // pred_region
      %257 = dma.done [#allocation3], 32
    $region29: #{tpu_custom_call.1} parent=1 // pred_fallthru
      _
    %258 = vsyncpa [#allocation3], 1

</llo_original>
